<compile_context>
chip_gen: v7x
topology: tpu7x:2x2x1
jax: 0.10.0
libtpu: 0.0.40
codegen_flags: <defaults>
</compile_context>

<pallas_src>
import jax
import jax.numpy as jnp
from jax.experimental import pallas as pl
from jax.experimental.pallas import tpu as pltpu

FC1_OUT = 32     # logical fc1 output features (matches nn.Linear(hidden, 32))
LANE = 128       # padded fc1 width -> lane-full vregs / MXU-friendly


def _critic_kernel(x_ref, w1_ref, b1_ref, w2_ref, b2_ref, out_ref):
    # fc1: (TB, H) @ (H, 128) + (1, 128)   (padded cols are exactly zero)
    h = jnp.dot(x_ref[...], w1_ref[...], preferred_element_type=jnp.float32)
    h = h + b1_ref[...]
    # F.leaky_relu default negative_slope = 0.01 (zeros stay zero in pad cols)
    h = jnp.where(h > 0, h, 0.01 * h)
    # state_value: N=1, so use VPU multiply + lane reduction instead of a
    # second MXU matmul. Padded w2 cols are zero -> numerically identical.
    v = jnp.sum(h * w2_ref[...], axis=-1, keepdims=True) + b2_ref[...]
    out_ref[...] = v.astype(out_ref.dtype)


def _round_up(n, m):
    return ((n + m - 1) // m) * m


def _default_tile_b(B, H):
    # Keep double-buffered x tiles (+ headroom) well inside the scoped VMEM
    # budget on every generation (v7x physical VMEM is only 64 MiB).
    per_buffer_budget = 16 * 1024 * 1024  # bytes allotted to one x tile
    cap = max(8, (per_buffer_budget // (H * 4)) // 8 * 8)
    return int(min(_round_up(B, 8), 1024, cap))


def critic_forward(x, w1p, b1p, w2p, b2p, *, tile_b=None):
    """x: (B, hidden) f32. Padded params from pad_critic_params. Returns (B, 1) f32."""
    B, H = x.shape
    if tile_b is None:
        tile_b = _default_tile_b(B, H)
    tile_b = max(8, _round_up(tile_b, 8))

    # Pad batch to a multiple of the tile so the grid covers it exactly.
    Bp = _round_up(B, tile_b)
    if Bp != B:
        x = jnp.pad(x, ((0, Bp - B), (0, 0)))

    grid = (pl.cdiv(Bp, tile_b),)

    out = pl.pallas_call(
        _critic_kernel,
        out_shape=jax.ShapeDtypeStruct((Bp, 1), jnp.float32),
        grid=grid,
        in_specs=[
            # x: streamed batch tiles (double-buffered by the pipeline)
            pl.BlockSpec((tile_b, H), lambda i: (i, 0)),
            # weights/biases: VMEM-resident across all grid steps
            pl.BlockSpec((H, LANE), lambda i: (0, 0)),
            pl.BlockSpec((1, LANE), lambda i: (0, 0)),
            pl.BlockSpec((1, LANE), lambda i: (0, 0)),
            pl.BlockSpec((1, 1), lambda i: (0, 0)),
        ],
        out_specs=pl.BlockSpec((tile_b, 1), lambda i: (i, 0)),
        compiler_params=pltpu.CompilerParams(
            dimension_semantics=("parallel",),      # megacore sharding on v7x
            vmem_limit_bytes=48 * 1024 * 1024,      # fits v7x 64 MiB physical
        ),
    )(x, w1p, b1p, w2p, b2p)

    return out[:B]


def init_critic_params(key, hidden_size):
    """Deterministic init matching PyTorch nn.Linear default (U[-1/sqrt(fan_in), +])."""
    k1, k2, k3, k4 = jax.random.split(key, 4)
    bound1 = 1.0 / jnp.sqrt(hidden_size)
    w1 = jax.random.uniform(k1, (hidden_size, FC1_OUT), jnp.float32, -bound1, bound1)
    b1 = jax.random.uniform(k2, (1, FC1_OUT), jnp.float32, -bound1, bound1)
    bound2 = 1.0 / jnp.sqrt(float(FC1_OUT))
    w2 = jax.random.uniform(k3, (FC1_OUT, 1), jnp.float32, -bound2, bound2)
    b2 = jax.random.uniform(k4, (1, 1), jnp.float32, -bound2, bound2)
    return w1, b1, w2, b2


def pad_critic_params(w1, b1, w2, b2):
    """One-time zero-pad of fc1 to 128 lanes; fc2 weights laid out as a (1,128) row."""
    H = w1.shape[0]
    w1p = jnp.zeros((H, LANE), jnp.float32).at[:, :FC1_OUT].set(w1.astype(jnp.float32))
    b1p = jnp.zeros((1, LANE), jnp.float32).at[:, :FC1_OUT].set(
        b1.reshape(1, FC1_OUT).astype(jnp.float32))
    w2p = jnp.zeros((1, LANE), jnp.float32).at[:, :FC1_OUT].set(
        w2.reshape(FC1_OUT).astype(jnp.float32)[None, :])
    b2p = b2.reshape(1, 1).astype(jnp.float32)
    return w1p, b1p, w2p, b2p


def _reference(x, w1, b1, w2, b2):
    h = x @ w1 + b1
    h = jnp.where(h > 0, h, 0.01 * h)
    return h @ w2 + b2


if __name__ == "__main__":
    key = jax.random.PRNGKey(0)
    kx, kp, kx2 = jax.random.split(key, 3)

    batch, hidden = 2, 32
    x = jax.random.normal(kx, (batch, hidden), jnp.float32)
    w1, b1, w2, b2 = init_critic_params(kp, hidden)
    w1p, b1p, w2p, b2p = pad_critic_params(w1, b1, w2, b2)

    out = critic_forward(x, w1p, b1p, w2p, b2p)
    jax.block_until_ready(out)

    ref = _reference(x, w1, b1, w2, b2)
    assert out.shape == (batch, 1)
    assert jnp.allclose(out, ref, atol=1e-5), "mismatch vs reference (small batch)"

    # Exercise the multi-step grid + batch-padding path.
    big_batch = 300
    x2 = jax.random.normal(kx2, (big_batch, hidden), jnp.float32)
    out2 = critic_forward(x2, w1p, b1p, w2p, b2p, tile_b=128)
    jax.block_until_ready(out2)
    ref2 = _reference(x2, w1, b1, w2, b2)
    assert out2.shape == (big_batch, 1)
    assert jnp.allclose(out2, ref2, atol=1e-5), "mismatch vs reference (tiled batch)"

    print("KERNEL_OK")
</pallas_src>

<mosaic_0001>
module attributes {stable_mosaic.version = 11 : i64} {
  func.func @_critic_kernel(%arg0: i32, %arg1: memref<8x32xf32, #tpu.memory_space<vmem>>, %arg2: memref<32x128xf32, #tpu.memory_space<vmem>>, %arg3: memref<1x128xf32, #tpu.memory_space<vmem>>, %arg4: memref<1x128xf32, #tpu.memory_space<vmem>>, %arg5: memref<1x1xf32, #tpu.memory_space<vmem>>, %arg6: memref<8x1xf32, #tpu.memory_space<vmem>>) attributes {dimension_semantics = [#tpu.dimension_semantics<parallel>], iteration_bounds = array<i64: 1>, scalar_prefetch = 0 : i64, scratch_operands = 0 : i64, tpu.core_type = #tpu.core_type<tc>, window_params = [{transform_indices = @transform_0, window_bounds = array<i64: 8, 32>}, {pipeline_mode = #tpu.pipeline_mode<synchronous>, transform_indices = @transform_1, window_bounds = array<i64: 32, 128>}, {pipeline_mode = #tpu.pipeline_mode<synchronous>, transform_indices = @transform_2, window_bounds = array<i64: 1, 128>}, {pipeline_mode = #tpu.pipeline_mode<synchronous>, transform_indices = @transform_3, window_bounds = array<i64: 1, 128>}, {pipeline_mode = #tpu.pipeline_mode<synchronous>, transform_indices = @transform_4, window_bounds = array<i64: 1, 1>}, {transform_indices = @transform_5, window_bounds = array<i64: 8, 1>}]} {
    %c0 = arith.constant 0 : index
    %c0_0 = arith.constant 0 : index
    %0 = vector.load %arg1[%c0, %c0_0] : memref<8x32xf32, #tpu.memory_space<vmem>>, vector<8x32xf32>
    %c0_1 = arith.constant 0 : index
    %c0_2 = arith.constant 0 : index
    %1 = vector.load %arg2[%c0_1, %c0_2] : memref<32x128xf32, #tpu.memory_space<vmem>>, vector<32x128xf32>
    %cst = arith.constant dense<0.000000e+00> : vector<8x128xf32>
    %2 = tpu.matmul %0, %1, %cst {dimension_numbers = #tpu.dot_dimension_numbers<[1], [0], [0], [1], [0, 0, 1, 1], [], []>} : vector<8x32xf32>, vector<32x128xf32>, vector<8x128xf32> -> vector<8x128xf32>
    %c0_3 = arith.constant 0 : index
    %c0_4 = arith.constant 0 : index
    %3 = vector.load %arg3[%c0_3, %c0_4] : memref<1x128xf32, #tpu.memory_space<vmem>>, vector<1x128xf32>
    %4 = vector.broadcast %3 : vector<1x128xf32> to vector<8x128xf32>
    %5 = arith.addf %2, %4 : vector<8x128xf32>
    %cst_5 = arith.constant 0.000000e+00 : f32
    %6 = vector.broadcast %cst_5 : f32 to vector<8x128xf32>
    %7 = arith.cmpf ogt, %5, %6 : vector<8x128xf32>
    %cst_6 = arith.constant 0.00999999977 : f32
    %8 = vector.broadcast %cst_6 : f32 to vector<8x128xf32>
    %9 = arith.mulf %8, %5 : vector<8x128xf32>
    %10 = arith.select %7, %5, %9 : vector<8x128xi1>, vector<8x128xf32>
    %c0_7 = arith.constant 0 : index
    %c0_8 = arith.constant 0 : index
    %11 = vector.load %arg4[%c0_7, %c0_8] : memref<1x128xf32, #tpu.memory_space<vmem>>, vector<1x128xf32>
    %12 = vector.broadcast %11 : vector<1x128xf32> to vector<8x128xf32>
    %13 = arith.mulf %10, %12 : vector<8x128xf32>
    %cst_9 = arith.constant dense<0.000000e+00> : vector<8xf32>
    %14 = vector.multi_reduction <add>, %13, %cst_9 [1] : vector<8x128xf32> to vector<8xf32>
    %15 = vector.shape_cast %14 : vector<8xf32> to vector<8x1xf32>
    %c0_10 = arith.constant 0 : index
    %c0_11 = arith.constant 0 : index
    %16 = vector.load %arg5[%c0_10, %c0_11] : memref<1x1xf32, #tpu.memory_space<vmem>>, vector<1x1xf32>
    %17 = vector.broadcast %16 : vector<1x1xf32> to vector<8x1xf32>
    %18 = arith.addf %15, %17 : vector<8x1xf32>
    %c0_12 = arith.constant 0 : index
    %c0_13 = arith.constant 0 : index
    %19 = vector.load %arg6[%c0_12, %c0_13] : memref<8x1xf32, #tpu.memory_space<vmem>>, vector<8x1xf32>
    tpu.vector_store %arg6[%c0_12, %c0_13], %18 {strides = array<i32>} : memref<8x1xf32, #tpu.memory_space<vmem>>, vector<8x1xf32>,
    return
  }
  func.func @transform_0(%arg0: i32) -> (i32, i32) {
    %c0_i32 = arith.constant 0 : i32
    %c0_i32_0 = arith.constant 0 : i32
    return %arg0, %c0_i32 : i32, i32
  }
  func.func @transform_1(%arg0: i32) -> (i32, i32) {
    %c0_i32 = arith.constant 0 : i32
    %c0_i32_0 = arith.constant 0 : i32
    %c0_i32_1 = arith.constant 0 : i32
    return %c0_i32, %c0_i32_0 : i32, i32
  }
  func.func @transform_2(%arg0: i32) -> (i32, i32) {
    %c0_i32 = arith.constant 0 : i32
    %c0_i32_0 = arith.constant 0 : i32
    %c0_i32_1 = arith.constant 0 : i32
    return %c0_i32, %c0_i32_0 : i32, i32
  }
  func.func @transform_3(%arg0: i32) -> (i32, i32) {
    %c0_i32 = arith.constant 0 : i32
    %c0_i32_0 = arith.constant 0 : i32
    %c0_i32_1 = arith.constant 0 : i32
    return %c0_i32, %c0_i32_0 : i32, i32
  }
  func.func @transform_4(%arg0: i32) -> (i32, i32) {
    %c0_i32 = arith.constant 0 : i32
    %c0_i32_0 = arith.constant 0 : i32
    %c0_i32_1 = arith.constant 0 : i32
    return %c0_i32, %c0_i32_0 : i32, i32
  }
  func.func @transform_5(%arg0: i32) -> (i32, i32) {
    %c0_i32 = arith.constant 0 : i32
    %c0_i32_0 = arith.constant 0 : i32
    return %arg0, %c0_i32 : i32, i32
  }
}

</mosaic_0001>

<llo_original>
// kernel: tpu_custom_call.1
$region0: #{tpu_custom_call.1}
  #allocation0 [shape = 'u32[]', space=smem, size = 0x4, offset = 0x4, fixed_abs, tag = 'smem constant byte address 0x4 - core index']
  #allocation1 [shape = 'u32[144,128]{1,0:T(1,128)}', space=vmem, size = 0x12000, scoped, tag = 'internal scratch']
  #allocation2 [shape = 'f32[1,1]{1,0:T(1,128)S(1)}', space=vmem, size = 0x200, scoped, tag = 'scoped memory for tpu_custom_call.1']
  %s0 = inlined_call_operand.hbm [shape: f32[8,32], index: 0, kind: input, shape index: {}]
  %s1 = inlined_call_operand.hbm [shape: f32[32,128], index: 1, kind: input, shape index: {}]
  %s2 = inlined_call_operand.vmem [shape: f32[1,128], index: 2, kind: input, shape index: {}]
  %s3 = inlined_call_operand.vmem [shape: f32[1,128], index: 3, kind: input, shape index: {}]
  %s4 = inlined_call_operand.<no memory space> [shape: f32[1,1], index: 4, kind: input, shape index: {}]
  %s5 = inlined_call_operand.vmem [shape: f32[8,1], index: 5, kind: output, shape index: {}]
  %s6 = sld [smem:[#allocation0]]
  $region38: #{tpu_custom_call.1} parent=0
    _
  %s8 = ssub.s32 1, %s6
  %s9 = scalar_select 0, %s8, %s6
  %v10 = vstv %s4
  %11 = vst [vmem:[#allocation2] sm:$0x1] %v10
  $region1: #{tpu_custom_call.1} parent=0
    #allocation3 [shape = 'u8[4096]{0}', space=vmem, size = 0x1000, scoped, tag = 'input window, operand 0, single buffered']
    #allocation4 [shape = 's32[1]{0}', space=sflag, size = 0x4, scoped, tag = 'scoped memory for tpu_custom_call.1']
    #allocation5 [shape = 'u8[16384]{0}', space=vmem, size = 0x4000, scoped, tag = 'input window, operand 1, single buffered']
    #allocation6 [shape = 's32[1]{0}', space=sflag, size = 0x4, scoped, tag = 'scoped memory for tpu_custom_call.1']
    %12 = vsyncpa [#allocation4], 0
    %13 = vsyncpa [#allocation6], 0
    // Predicated region
    $region2: #{tpu_custom_call.1} parent=1 // pred_check
      _
    $region3: #{tpu_custom_call.1} parent=1 // pred_check_branch
      %15 = sbr.rel (0) target = $region5
    $region4: #{tpu_custom_call.1} parent=1 // pred_region
      %s17 = ssub.s32 128, 128
      %18 = vsyncadd [#allocation4], %s17
      %s20 = sshll.u32 [#allocation3], 4
      %s21 = int_to_ptr.vmem [resolvable:$true] %s20
      %23 = dma.hbm_to_vmem [thread:$0]  %s0, 128, %s21, [#allocation4]
    $region5: #{tpu_custom_call.1} parent=1 // pred_fallthru
      _
    // Predicated region
    $region6: #{tpu_custom_call.1} parent=1 // pred_check
      _
    $region7: #{tpu_custom_call.1} parent=1 // pred_check_branch
      %25 = sbr.rel (0) target = $region9
    $region8: #{tpu_custom_call.1} parent=1 // pred_region
      %s27 = ssub.s32 512, 512
      %28 = vsyncadd [#allocation6], %s27
      %s29 = sshll.u32 [#allocation5], 4
      %s30 = int_to_ptr.vmem [resolvable:$true] %s29
      %35 = dma.hbm_to_vmem [thread:$0]  %s1, 512, %s30, [#allocation6], 128, 128, 8
    $region9: #{tpu_custom_call.1} parent=1 // pred_fallthru
      _
    // Predicated region
    $region10: #{tpu_custom_call.1} parent=1 // pred_check
      _
    $region11: #{tpu_custom_call.1} parent=1 // pred_check_branch
      %37 = sbr.rel (0) target = $region13
    $region12: #{tpu_custom_call.1} parent=1 // pred_region
      _
    $region13: #{tpu_custom_call.1} parent=1 // pred_fallthru
      _
    // Predicated region
    $region14: #{tpu_custom_call.1} parent=1 // pred_check
      _
    $region15: #{tpu_custom_call.1} parent=1 // pred_check_branch
      %39 = sbr.rel (0) target = $region17
    $region16: #{tpu_custom_call.1} parent=1 // pred_region
      _
    $region17: #{tpu_custom_call.1} parent=1 // pred_fallthru
      _
    // Predicated region
    $region18: #{tpu_custom_call.1} parent=1 // pred_check
      _
    $region19: #{tpu_custom_call.1} parent=1 // pred_check_branch
      %41 = sbr.rel (0) target = $region21
    $region20: #{tpu_custom_call.1} parent=1 // pred_region
      _
    $region21: #{tpu_custom_call.1} parent=1 // pred_fallthru
      _
    // Predicated region
    $region22: #{tpu_custom_call.1} parent=1 // pred_check
      _
    $region23: #{tpu_custom_call.1} parent=1 // pred_check_branch
      %43 = sbr.rel (0) target = $region25
    $region24: #{tpu_custom_call.1} parent=1 // pred_region
      %44 = dma.done [#allocation4], 128
    $region25: #{tpu_custom_call.1} parent=1 // pred_fallthru
      _
    // Predicated region
    $region26: #{tpu_custom_call.1} parent=1 // pred_check
      _
    $region27: #{tpu_custom_call.1} parent=1 // pred_check_branch
      %46 = sbr.rel (0) target = $region29
    $region28: #{tpu_custom_call.1} parent=1 // pred_region
      %47 = dma.done [#allocation6], 512
    $region29: #{tpu_custom_call.1} parent=1 // pred_fallthru
      _
    %v48 = vld [vmem:[#allocation3] sm:$0xff]
    %v49 = vld [vmem:[#allocation5] sm:$0xff]
    %v50 = vld [vmem:[#allocation5 + $0x8] sm:$0xff]
    %v51 = vld [vmem:[#allocation5 + $0x10] sm:$0xff]
    %v52 = vld [vmem:[#allocation5 + $0x18] sm:$0xff]
    %v53 = vld [vmem:[%s2] sm:$0x1]
    %v55 = vlaneseq
    %v56 = vshrl.u32 %v55, 7
    %v57 = vsub.s32 0, %v56
    %v58 = vrot.slane %v53, %v57
    %vm60 = vcmask 261120
    %v62 = vsel %vm60, %v48, 0
    %64 = vmatprep.subr.mxu0 0.0
    %65 = vmatpush1.msra.mxu0 %v49
    %66 = vmatprep.subr.mxu0 0.0
    %67 = vmatpush1.msra.mxu0 %v50
    %68 = vmatprep.subr.mxu0 0.0
    %69 = vmatpush1.msra.mxu0 %v51
    %70 = vmatprep.subr.mxu0 0.0
    %71 = vmatpush1.msra.mxu0 %v52
    %72 = vmatprep.subr.mxu0 0.0
    %73 = vmatpush1.msra.mxu0 0.0
    %74 = vmatprep.subr.mxu0 0.0
    %75 = vmatpush1.msra.mxu0 0.0
    %76 = vmatprep.subr.mxu0 0.0
    %77 = vmatpush1.msra.mxu0 0.0
    %78 = vmatprep.subr.mxu0 0.0
    %79 = vmatpush1.msra.mxu0 0.0
    %80 = vmatprep.subr.mxu0 0.0
    %81 = vmatpush1.msra.mxu0 0.0
    %82 = vmatprep.subr.mxu0 0.0
    %83 = vmatpush1.msra.mxu0 0.0
    %84 = vmatprep.subr.mxu0 0.0
    %85 = vmatpush1.msra.mxu0 0.0
    %86 = vmatprep.subr.mxu0 0.0
    %87 = vmatpush1.msra.mxu0 0.0
    %88 = vmatprep.subr.mxu0 0.0
    %89 = vmatpush1.msra.mxu0 0.0
    %90 = vmatprep.subr.mxu0 0.0
    %91 = vmatpush1.msra.mxu0 0.0
    %92 = vmatprep.subr.mxu0 0.0
    %93 = vmatpush1.msra.mxu0 0.0
    %94 = vmatprep.subr.mxu0 0.0
    %95 = vmatpush1.msra.mxu0 0.0
    %96 = vmatprep.subr.mxu0 0.0
    %97 = vmatpush1.msra.mxu0 0.0
    %98 = vmatprep.subr.mxu0 0.0
    %99 = vmatpush1.msra.mxu0 0.0
    %100 = vmatprep.subr.mxu0 0.0
    %101 = vmatpush1.msra.mxu0 0.0
    %102 = vmatprep.subr.mxu0 0.0
    %103 = vmatpush1.msra.mxu0 0.0
    %104 = vmatprep.subr.mxu0 0.0
    %105 = vmatpush1.msra.mxu0 0.0
    %106 = vmatprep.subr.mxu0 0.0
    %107 = vmatpush1.msra.mxu0 0.0
    %108 = vmatprep.subr.mxu0 0.0
    %109 = vmatpush1.msra.mxu0 0.0
    %110 = vmatprep.subr.mxu0 0.0
    %111 = vmatpush1.msra.mxu0 0.0
    %112 = vmatprep.subr.mxu0 0.0
    %113 = vmatpush1.msra.mxu0 0.0
    %114 = vmatprep.subr.mxu0 0.0
    %115 = vmatpush1.msra.mxu0 0.0
    %116 = vmatprep.subr.mxu0 0.0
    %117 = vmatpush1.msra.mxu0 0.0
    %118 = vmatprep.subr.mxu0 0.0
    %119 = vmatpush1.msra.mxu0 0.0
    %120 = vmatprep.subr.mxu0 0.0
    %121 = vmatpush1.msra.mxu0 0.0
    %122 = vmatprep.subr.mxu0 0.0
    %123 = vmatpush1.msra.mxu0 0.0
    %124 = vmatprep.subr.mxu0 0.0
    %125 = vmatpush1.msra.mxu0 0.0
    %126 = vmatprep.subr.mxu0 0.0
    %127 = vmatpush1.msra.mxu0 0.0
    %128 = vmatprep.mubr.f32.mxu0 0.0
    %129 = vmatmul.mubr.f32.gmra.mrb[0].mxu0 %v62
    %v130 = vpop.f32.mrb[0].mxu0
    %v131 = vadd.f32 %v58, %v130
    %v132 = vpop.f32.mrb[0].mxu0
    %133 = vdwg.mxu0
    %vm134 = vcmp.gt.f32.partialorder %v131, 0.0
    %v135 = vmul.f32 %v131, 0.01
    %v136 = vsel %vm134, %v131, %v135
    %v137 = vld [vmem:[%s3] sm:$0x1]
    %v139 = vlaneseq
    %v140 = vshrl.u32 %v139, 7
    %v141 = vsub.s32 0, %v140
    %v142 = vrot.slane %v137, %v141
    %v144 = vmul.f32 %v136, %v142
    %145 = vadd.xlane.f32.xlu0 %v144
    %v146 = vpop.xlane.xlu0 %145
    %v147 = vld [vmem:[#allocation2] sm:$0x1]
    %v149 = vlaneseq
    %v150 = vshrl.u32 %v149, 7
    %v151 = vsub.s32 0, %v150
    %v152 = vrot.slane %v147, %v151
    %v154 = vadd.f32 %v146, %v152
    %vm155 = vcmask 7168
    %156 = vst.msk [vmem:[%s5] sm:$0xff] %vm155, %v154
    // Predicated region
    $region30: #{tpu_custom_call.1} parent=1 // pred_check
      _
    $region31: #{tpu_custom_call.1} parent=1 // pred_check_branch
      %158 = sbr.rel (0) target = $region33
    $region32: #{tpu_custom_call.1} parent=1 // pred_region
      _
    $region33: #{tpu_custom_call.1} parent=1 // pred_fallthru
      _
    // Predicated region
    $region34: #{tpu_custom_call.1} parent=1 // pred_check
      _
    $region35: #{tpu_custom_call.1} parent=1 // pred_check_branch
      %160 = sbr.rel (0) target = $region37
    $region36: #{tpu_custom_call.1} parent=1 // pred_region
      _
    $region37: #{tpu_custom_call.1} parent=1 // pred_fallthru
      _
    %161 = vsyncpa [#allocation4], 1
    %162 = vsyncpa [#allocation6], 1

</llo_original>
